<compile_context>
chip_gen: v6e
topology: v6e:2x2x1
jax: 0.10.0
libtpu: 0.0.40
codegen_flags: <defaults>
</compile_context>

<pallas_src>
import jax
import jax.numpy as jnp
from jax.experimental import pallas as pl
from jax.experimental.pallas import tpu as pltpu

N_HIDDEN = 50     # matches the PyTorch default n_hidden=50
D_IN = 2          # Linear(2, n_hidden)
D_OUT = 1         # Linear(n_hidden, 1)

LANE = 128
SUBLANE = 8
TB_MAX = 512      # batch tile (rows per grid step); sweep 512-2048 if desired


def _round_up(n, m):
    return ((n + m - 1) // m) * m


def _pad_to(x, rows, cols):
    r, c = x.shape
    return jnp.pad(x, ((0, rows - r), (0, cols - c)))


def _mlp_kernel(x_ref, w1_ref, b1_ref, w2_ref, b2_ref, w3_ref, b3_ref, o_ref):
    # x_ref: (TB, 2) -- unpadded features, streamed per batch tile.
    x = x_ref[...]
    w1 = w1_ref[...]                                     # (8, 128); only rows 0,1 real

    # Layer 1 on the VPU: K=2 contraction as explicit broadcast multiplies.
    h1 = x[:, 0:1] * w1[0:1, :] + x[:, 1:2] * w1[1:2, :] + b1_ref[...]
    h1 = jnp.maximum(h1, 0.0)                            # (TB, 128)

    # Layer 2 on the MXU.
    h2 = jnp.dot(h1, w2_ref[...], preferred_element_type=jnp.float32) + b2_ref[...]
    h2 = jnp.maximum(h2, 0.0)                            # (TB, 128)

    # Layer 3: VPU multiply + lane reduce -> narrow (TB, 1) output, no 128-wide store.
    o_ref[...] = jnp.sum(h2 * w3_ref[...], axis=-1, keepdims=True) + b3_ref[...]


def prepare_params(params):
    """Pad/layout the weights once (outside the per-call forward).
    Weights are stored as (in_features, out_features) = W_pytorch.T."""
    w1, b1, w2, b2, w3, b3 = params
    w1_p = _pad_to(w1.astype(jnp.float32), SUBLANE, LANE)      # (8, 128)
    b1_p = _pad_to(b1.astype(jnp.float32)[None, :], 1, LANE)   # (1, 128)
    w2_p = _pad_to(w2.astype(jnp.float32), LANE, LANE)         # (128, 128)
    b2_p = _pad_to(b2.astype(jnp.float32)[None, :], 1, LANE)   # (1, 128)
    w3_p = _pad_to(w3.astype(jnp.float32).T, 1, LANE)          # (1, 128) row vector
    b3_p = b3.astype(jnp.float32).reshape(1, 1)                # (1, 1)
    return (w1_p, b1_p, w2_p, b2_p, w3_p, b3_p)


@jax.jit
def d_forward(x, padded_params):
    """Forward pass of module D. x: (B, 2) float32 -> (B, 1) float32."""
    w1_p, b1_p, w2_p, b2_p, w3_p, b3_p = padded_params

    B = x.shape[0]
    TB = min(TB_MAX, _round_up(B, SUBLANE))
    B_pad = _round_up(B, TB)

    x_p = jnp.pad(x.astype(jnp.float32), ((0, B_pad - B), (0, 0)))   # (B_pad, 2)

    const = lambda shape: pl.BlockSpec(shape, lambda i: (0, 0))

    out = pl.pallas_call(
        _mlp_kernel,
        out_shape=jax.ShapeDtypeStruct((B_pad, D_OUT), jnp.float32),
        grid=(B_pad // TB,),
        in_specs=[
            pl.BlockSpec((TB, D_IN), lambda i: (i, 0)),   # x: streamed per tile
            const((SUBLANE, LANE)),                       # w1 (resident)
            const((1, LANE)),                             # b1
            const((LANE, LANE)),                          # w2
            const((1, LANE)),                             # b2
            const((1, LANE)),                             # w3 row
            const((1, 1)),                                # b3
        ],
        out_specs=pl.BlockSpec((TB, D_OUT), lambda i: (i, 0)),
        compiler_params=pltpu.CompilerParams(
            dimension_semantics=("parallel",),            # v7x: split batch across TCs
        ),
    )(x_p, w1_p, b1_p, w2_p, b2_p, w3_p, b3_p)

    return out[:B, :]


def init_params(key, n_hidden=N_HIDDEN):
    """Deterministic init mimicking torch.nn.Linear default U(-1/sqrt(fan_in), +1/sqrt(fan_in)).
    Weights stored as (in_features, out_features)."""
    ks = jax.random.split(key, 6)

    def lin(kw, kb, fan_in, fan_out):
        bound = 1.0 / jnp.sqrt(jnp.float32(fan_in))
        w = jax.random.uniform(kw, (fan_in, fan_out), jnp.float32, -bound, bound)
        b = jax.random.uniform(kb, (fan_out,), jnp.float32, -bound, bound)
        return w, b

    w1, b1 = lin(ks[0], ks[1], D_IN, n_hidden)
    w2, b2 = lin(ks[2], ks[3], n_hidden, n_hidden)
    w3, b3 = lin(ks[4], ks[5], n_hidden, D_OUT)
    return (w1, b1, w2, b2, w3, b3)


def _reference(x, params):
    w1, b1, w2, b2, w3, b3 = params
    h1 = jnp.maximum(x @ w1 + b1, 0.0)
    h2 = jnp.maximum(h1 @ w2 + b2, 0.0)
    return h2 @ w3 + b3


if __name__ == "__main__":
    key = jax.random.PRNGKey(0)
    k_param, k_x = jax.random.split(key)

    params = init_params(k_param)
    padded_params = prepare_params(params)

    x = jax.random.normal(k_x, (8, D_IN), dtype=jnp.float32)  # batch=8, features=2

    y = d_forward(x, padded_params)
    y = jax.block_until_ready(y)

    y_ref = _reference(x, params)
    assert y.shape == (8, D_OUT)
    assert jnp.allclose(y, y_ref, atol=1e-5, rtol=1e-5), "Pallas output mismatch vs reference"

    # Also exercise a batch large enough to use multiple grid steps / partial tiles.
    x_big = jax.random.normal(jax.random.PRNGKey(1), (1031, D_IN), dtype=jnp.float32)
    y_big = jax.block_until_ready(d_forward(x_big, padded_params))
    assert y_big.shape == (1031, D_OUT)
    assert jnp.allclose(y_big, _reference(x_big, params), atol=1e-4, rtol=1e-4)

    print("KERNEL_OK")
</pallas_src>

<mosaic_0001>
module attributes {stable_mosaic.version = 11 : i64} {
  func.func @_mlp_kernel(%arg0: i32, %arg1: memref<8x2xf32, #tpu.memory_space<vmem>>, %arg2: memref<8x128xf32, #tpu.memory_space<vmem>>, %arg3: memref<1x128xf32, #tpu.memory_space<vmem>>, %arg4: memref<128x128xf32, #tpu.memory_space<vmem>>, %arg5: memref<1x128xf32, #tpu.memory_space<vmem>>, %arg6: memref<1x128xf32, #tpu.memory_space<vmem>>, %arg7: memref<1x1xf32, #tpu.memory_space<vmem>>, %arg8: memref<8x1xf32, #tpu.memory_space<vmem>>) attributes {dimension_semantics = [#tpu.dimension_semantics<parallel>], iteration_bounds = array<i64: 1>, scalar_prefetch = 0 : i64, scratch_operands = 0 : i64, tpu.core_type = #tpu.core_type<tc>, window_params = [{transform_indices = @transform_0, window_bounds = array<i64: 8, 2>}, {pipeline_mode = #tpu.pipeline_mode<synchronous>, transform_indices = @transform_1, window_bounds = array<i64: 8, 128>}, {pipeline_mode = #tpu.pipeline_mode<synchronous>, transform_indices = @transform_2, window_bounds = array<i64: 1, 128>}, {pipeline_mode = #tpu.pipeline_mode<synchronous>, transform_indices = @transform_3, window_bounds = array<i64: 128, 128>}, {pipeline_mode = #tpu.pipeline_mode<synchronous>, transform_indices = @transform_4, window_bounds = array<i64: 1, 128>}, {pipeline_mode = #tpu.pipeline_mode<synchronous>, transform_indices = @transform_5, window_bounds = array<i64: 1, 128>}, {pipeline_mode = #tpu.pipeline_mode<synchronous>, transform_indices = @transform_6, window_bounds = array<i64: 1, 1>}, {transform_indices = @transform_7, window_bounds = array<i64: 8, 1>}]} {
    %c0 = arith.constant 0 : index
    %c0_0 = arith.constant 0 : index
    %0 = vector.load %arg1[%c0, %c0_0] : memref<8x2xf32, #tpu.memory_space<vmem>>, vector<8x2xf32>
    %c0_1 = arith.constant 0 : index
    %c0_2 = arith.constant 0 : index
    %1 = vector.load %arg2[%c0_1, %c0_2] : memref<8x128xf32, #tpu.memory_space<vmem>>, vector<8x128xf32>
    %2 = vector.extract_strided_slice %0 {offsets = [0, 0], sizes = [8, 1], strides = [1, 1]} : vector<8x2xf32> to vector<8x1xf32>
    %3 = vector.extract_strided_slice %1 {offsets = [0, 0], sizes = [1, 128], strides = [1, 1]} : vector<8x128xf32> to vector<1x128xf32>
    %4 = vector.broadcast %2 : vector<8x1xf32> to vector<8x128xf32>
    %5 = vector.broadcast %3 : vector<1x128xf32> to vector<8x128xf32>
    %6 = arith.mulf %4, %5 : vector<8x128xf32>
    %7 = vector.extract_strided_slice %0 {offsets = [0, 1], sizes = [8, 1], strides = [1, 1]} : vector<8x2xf32> to vector<8x1xf32>
    %8 = vector.extract_strided_slice %1 {offsets = [1, 0], sizes = [1, 128], strides = [1, 1]} : vector<8x128xf32> to vector<1x128xf32>
    %9 = vector.broadcast %7 : vector<8x1xf32> to vector<8x128xf32>
    %10 = vector.broadcast %8 : vector<1x128xf32> to vector<8x128xf32>
    %11 = arith.mulf %9, %10 : vector<8x128xf32>
    %12 = arith.addf %6, %11 : vector<8x128xf32>
    %c0_3 = arith.constant 0 : index
    %c0_4 = arith.constant 0 : index
    %13 = vector.load %arg3[%c0_3, %c0_4] : memref<1x128xf32, #tpu.memory_space<vmem>>, vector<1x128xf32>
    %14 = vector.broadcast %13 : vector<1x128xf32> to vector<8x128xf32>
    %15 = arith.addf %12, %14 : vector<8x128xf32>
    %cst = arith.constant 0.000000e+00 : f32
    %16 = vector.broadcast %cst : f32 to vector<8x128xf32>
    %17 = arith.maximumf %15, %16 : vector<8x128xf32>
    %c0_5 = arith.constant 0 : index
    %c0_6 = arith.constant 0 : index
    %18 = vector.load %arg4[%c0_5, %c0_6] : memref<128x128xf32, #tpu.memory_space<vmem>>, vector<128x128xf32>
    %cst_7 = arith.constant dense<0.000000e+00> : vector<8x128xf32>
    %19 = tpu.matmul %17, %18, %cst_7 {dimension_numbers = #tpu.dot_dimension_numbers<[1], [0], [0], [1], [0, 0, 1, 1], [], []>} : vector<8x128xf32>, vector<128x128xf32>, vector<8x128xf32> -> vector<8x128xf32>
    %c0_8 = arith.constant 0 : index
    %c0_9 = arith.constant 0 : index
    %20 = vector.load %arg5[%c0_8, %c0_9] : memref<1x128xf32, #tpu.memory_space<vmem>>, vector<1x128xf32>
    %21 = vector.broadcast %20 : vector<1x128xf32> to vector<8x128xf32>
    %22 = arith.addf %19, %21 : vector<8x128xf32>
    %cst_10 = arith.constant 0.000000e+00 : f32
    %23 = vector.broadcast %cst_10 : f32 to vector<8x128xf32>
    %24 = arith.maximumf %22, %23 : vector<8x128xf32>
    %c0_11 = arith.constant 0 : index
    %c0_12 = arith.constant 0 : index
    %25 = vector.load %arg6[%c0_11, %c0_12] : memref<1x128xf32, #tpu.memory_space<vmem>>, vector<1x128xf32>
    %26 = vector.broadcast %25 : vector<1x128xf32> to vector<8x128xf32>
    %27 = arith.mulf %24, %26 : vector<8x128xf32>
    %cst_13 = arith.constant dense<0.000000e+00> : vector<8xf32>
    %28 = vector.multi_reduction <add>, %27, %cst_13 [1] : vector<8x128xf32> to vector<8xf32>
    %29 = vector.shape_cast %28 : vector<8xf32> to vector<8x1xf32>
    %c0_14 = arith.constant 0 : index
    %c0_15 = arith.constant 0 : index
    %30 = vector.load %arg7[%c0_14, %c0_15] : memref<1x1xf32, #tpu.memory_space<vmem>>, vector<1x1xf32>
    %31 = vector.broadcast %30 : vector<1x1xf32> to vector<8x1xf32>
    %32 = arith.addf %29, %31 : vector<8x1xf32>
    %c0_16 = arith.constant 0 : index
    %c0_17 = arith.constant 0 : index
    %33 = vector.load %arg8[%c0_16, %c0_17] : memref<8x1xf32, #tpu.memory_space<vmem>>, vector<8x1xf32>
    tpu.vector_store %arg8[%c0_16, %c0_17], %32 {strides = array<i32>} : memref<8x1xf32, #tpu.memory_space<vmem>>, vector<8x1xf32>,
    return
  }
  func.func @transform_0(%arg0: i32) -> (i32, i32) {
    %c0_i32 = arith.constant 0 : i32
    %c0_i32_0 = arith.constant 0 : i32
    return %arg0, %c0_i32 : i32, i32
  }
  func.func @transform_1(%arg0: i32) -> (i32, i32) {
    %c0_i32 = arith.constant 0 : i32
    %c0_i32_0 = arith.constant 0 : i32
    %c0_i32_1 = arith.constant 0 : i32
    return %c0_i32, %c0_i32_0 : i32, i32
  }
  func.func @transform_2(%arg0: i32) -> (i32, i32) {
    %c0_i32 = arith.constant 0 : i32
    %c0_i32_0 = arith.constant 0 : i32
    %c0_i32_1 = arith.constant 0 : i32
    return %c0_i32, %c0_i32_0 : i32, i32
  }
  func.func @transform_3(%arg0: i32) -> (i32, i32) {
    %c0_i32 = arith.constant 0 : i32
    %c0_i32_0 = arith.constant 0 : i32
    %c0_i32_1 = arith.constant 0 : i32
    return %c0_i32, %c0_i32_0 : i32, i32
  }
  func.func @transform_4(%arg0: i32) -> (i32, i32) {
    %c0_i32 = arith.constant 0 : i32
    %c0_i32_0 = arith.constant 0 : i32
    %c0_i32_1 = arith.constant 0 : i32
    return %c0_i32, %c0_i32_0 : i32, i32
  }
  func.func @transform_5(%arg0: i32) -> (i32, i32) {
    %c0_i32 = arith.constant 0 : i32
    %c0_i32_0 = arith.constant 0 : i32
    %c0_i32_1 = arith.constant 0 : i32
    return %c0_i32, %c0_i32_0 : i32, i32
  }
  func.func @transform_6(%arg0: i32) -> (i32, i32) {
    %c0_i32 = arith.constant 0 : i32
    %c0_i32_0 = arith.constant 0 : i32
    %c0_i32_1 = arith.constant 0 : i32
    return %c0_i32, %c0_i32_0 : i32, i32
  }
  func.func @transform_7(%arg0: i32) -> (i32, i32) {
    %c0_i32 = arith.constant 0 : i32
    %c0_i32_0 = arith.constant 0 : i32
    return %arg0, %c0_i32 : i32, i32
  }
}

</mosaic_0001>

<llo_original>
// kernel: d_forward.1
$region0: #{d_forward.1}
  #allocation0 [shape = 'u32[]', space=smem, size = 0x4, offset = 0x4, fixed_abs, tag = 'smem constant byte address 0x4 - core index']
  #allocation1 [shape = 'u32[144,128]{1,0:T(1,128)}', space=vmem, size = 0x12000, scoped, tag = 'internal scratch']
  #allocation2 [shape = 'f32[1,1]{1,0:T(1,128)S(1)}', space=vmem, size = 0x200, scoped, tag = 'scoped memory for d_forward.1']
  %s0 = inlined_call_operand.vmem [shape: f32[8,2], index: 0, kind: input, shape index: {}]
  %s1 = inlined_call_operand.vmem [shape: f32[8,128], index: 1, kind: input, shape index: {}]
  %s2 = inlined_call_operand.vmem [shape: f32[1,128], index: 2, kind: input, shape index: {}]
  %s3 = inlined_call_operand.hbm [shape: f32[128,128], index: 3, kind: input, shape index: {}]
  %s4 = inlined_call_operand.vmem [shape: f32[1,128], index: 4, kind: input, shape index: {}]
  %s5 = inlined_call_operand.vmem [shape: f32[1,128], index: 5, kind: input, shape index: {}]
  %s6 = inlined_call_operand.<no memory space> [shape: f32[1,1], index: 6, kind: input, shape index: {}]
  %s7 = inlined_call_operand.vmem [shape: f32[8,1], index: 7, kind: output, shape index: {}]
  %s8 = sld [smem:[#allocation0]]
  $region42: #{d_forward.1} parent=0
    _
  %s10 = ssub.s32 1, %s8
  %s11 = scalar_select 0, %s10, %s8
  %v12 = vstv %s6
  %13 = vst [vmem:[#allocation2] sm:$0x1] %v12
  $region1: #{d_forward.1} parent=0
    #allocation3 [shape = 'u8[65536]{0}', space=vmem, size = 0x10000, scoped, tag = 'input window, operand 3, single buffered']
    #allocation4 [shape = 's32[1]{0}', space=sflag, size = 0x4, scoped, tag = 'scoped memory for d_forward.1']
    %14 = vsyncpa [#allocation4], 0
    // Predicated region
    $region2: #{d_forward.1} parent=1 // pred_check
      _
    $region3: #{d_forward.1} parent=1 // pred_check_branch
      %16 = sbr.rel (0) target = $region5
    $region4: #{d_forward.1} parent=1 // pred_region
      _
    $region5: #{d_forward.1} parent=1 // pred_fallthru
      _
    // Predicated region
    $region6: #{d_forward.1} parent=1 // pred_check
      _
    $region7: #{d_forward.1} parent=1 // pred_check_branch
      %18 = sbr.rel (0) target = $region9
    $region8: #{d_forward.1} parent=1 // pred_region
      _
    $region9: #{d_forward.1} parent=1 // pred_fallthru
      _
    // Predicated region
    $region10: #{d_forward.1} parent=1 // pred_check
      _
    $region11: #{d_forward.1} parent=1 // pred_check_branch
      %20 = sbr.rel (0) target = $region13
    $region12: #{d_forward.1} parent=1 // pred_region
      _
    $region13: #{d_forward.1} parent=1 // pred_fallthru
      _
    // Predicated region
    $region14: #{d_forward.1} parent=1 // pred_check
      _
    $region15: #{d_forward.1} parent=1 // pred_check_branch
      %22 = sbr.rel (0) target = $region17
    $region16: #{d_forward.1} parent=1 // pred_region
      %s24 = ssub.s32 2048, 2048
      %25 = vsyncadd [#allocation4], %s24
      %s26 = sshll.u32 [#allocation3], 4
      %s27 = int_to_ptr.vmem [resolvable:$true] %s26
      %32 = dma.hbm_to_vmem [thread:$0]  %s3, 2048, %s27, [#allocation4], 128, 128, 8
    $region17: #{d_forward.1} parent=1 // pred_fallthru
      _
    // Predicated region
    $region18: #{d_forward.1} parent=1 // pred_check
      _
    $region19: #{d_forward.1} parent=1 // pred_check_branch
      %34 = sbr.rel (0) target = $region21
    $region20: #{d_forward.1} parent=1 // pred_region
      _
    $region21: #{d_forward.1} parent=1 // pred_fallthru
      _
    // Predicated region
    $region22: #{d_forward.1} parent=1 // pred_check
      _
    $region23: #{d_forward.1} parent=1 // pred_check_branch
      %36 = sbr.rel (0) target = $region25
    $region24: #{d_forward.1} parent=1 // pred_region
      _
    $region25: #{d_forward.1} parent=1 // pred_fallthru
      _
    // Predicated region
    $region26: #{d_forward.1} parent=1 // pred_check
      _
    $region27: #{d_forward.1} parent=1 // pred_check_branch
      %38 = sbr.rel (0) target = $region29
    $region28: #{d_forward.1} parent=1 // pred_region
      _
    $region29: #{d_forward.1} parent=1 // pred_fallthru
      _
    // Predicated region
    $region30: #{d_forward.1} parent=1 // pred_check
      _
    $region31: #{d_forward.1} parent=1 // pred_check_branch
      %40 = sbr.rel (0) target = $region33
    $region32: #{d_forward.1} parent=1 // pred_region
      %41 = dma.done [#allocation4], 2048
    $region33: #{d_forward.1} parent=1 // pred_fallthru
      _
    %v42 = vld [vmem:[%s0] sm:$0xff]
    %v43 = vld [vmem:[%s1] sm:$0xff]
    %45 = vset.pattern.permute.xlu0 0
    %46 = vperm.xlu0 %45, %v42
    %v47 = vpop.permute.xlu0 %46
    %v49 = vlaneseq
    %v50 = vshrl.u32 %v49, 7
    %v51 = vsub.s32 0, %v50
    %v52 = vrot.slane %v43, %v51
    %v53 = vmul.f32 %v47, %v52
    %54 = vset.pattern.permute.xlu0 1
    %55 = vperm.xlu0 %54, %v42
    %v56 = vpop.permute.xlu0 %55
    %v58 = vlaneseq
    %v59 = vshrl.u32 %v58, 7
    %v60 = vsub.s32 1, %v59
    %v61 = vrot.slane %v43, %v60
    %v62 = vmul.f32 %v56, %v61
    %v63 = vadd.f32 %v53, %v62
    %v64 = vld [vmem:[%s2] sm:$0x1]
    %v66 = vlaneseq
    %v67 = vshrl.u32 %v66, 7
    %v68 = vsub.s32 0, %v67
    %v69 = vrot.slane %v64, %v68
    %v71 = vadd.f32 %v63, %v69
    %v72 = vmax.f32 %v71, 0.0
    %v73 = vld [vmem:[#allocation3] sm:$0xff]
    %v74 = vld [vmem:[#allocation3 + $0x8] sm:$0xff]
    %v75 = vld [vmem:[#allocation3 + $0x10] sm:$0xff]
    %v76 = vld [vmem:[#allocation3 + $0x18] sm:$0xff]
    %v77 = vld [vmem:[#allocation3 + $0x20] sm:$0xff]
    %v78 = vld [vmem:[#allocation3 + $0x28] sm:$0xff]
    %v79 = vld [vmem:[#allocation3 + $0x30] sm:$0xff]
    %v80 = vld [vmem:[#allocation3 + $0x38] sm:$0xff]
    %v81 = vld [vmem:[#allocation3 + $0x40] sm:$0xff]
    %v82 = vld [vmem:[#allocation3 + $0x48] sm:$0xff]
    %v83 = vld [vmem:[#allocation3 + $0x50] sm:$0xff]
    %v84 = vld [vmem:[#allocation3 + $0x58] sm:$0xff]
    %v85 = vld [vmem:[#allocation3 + $0x60] sm:$0xff]
    %v86 = vld [vmem:[#allocation3 + $0x68] sm:$0xff]
    %v87 = vld [vmem:[#allocation3 + $0x70] sm:$0xff]
    %v88 = vld [vmem:[#allocation3 + $0x78] sm:$0xff]
    %v89 = vld [vmem:[%s4] sm:$0x1]
    %v91 = vlaneseq
    %v92 = vshrl.u32 %v91, 7
    %v93 = vsub.s32 0, %v92
    %v94 = vrot.slane %v89, %v93
    %96 = vmatprep.subr.mxu0 0.0
    %97 = vmatpush1.msra.mxu0 %v88
    %98 = vmatprep.subr.mxu0 0.0
    %99 = vmatpush1.msra.mxu0 %v87
    %100 = vmatprep.subr.mxu0 0.0
    %101 = vmatpush1.msra.mxu0 %v86
    %102 = vmatprep.subr.mxu0 0.0
    %103 = vmatpush1.msra.mxu0 %v85
    %104 = vmatprep.subr.mxu0 0.0
    %105 = vmatpush1.msra.mxu0 %v84
    %106 = vmatprep.subr.mxu0 0.0
    %107 = vmatpush1.msra.mxu0 %v83
    %108 = vmatprep.subr.mxu0 0.0
    %109 = vmatpush1.msra.mxu0 %v82
    %110 = vmatprep.subr.mxu0 0.0
    %111 = vmatpush1.msra.mxu0 %v81
    %112 = vmatprep.subr.mxu0 0.0
    %113 = vmatpush1.msra.mxu0 %v80
    %114 = vmatprep.subr.mxu0 0.0
    %115 = vmatpush1.msra.mxu0 %v79
    %116 = vmatprep.subr.mxu0 0.0
    %117 = vmatpush1.msra.mxu0 %v78
    %118 = vmatprep.subr.mxu0 0.0
    %119 = vmatpush1.msra.mxu0 %v77
    %120 = vmatprep.subr.mxu0 0.0
    %121 = vmatpush1.msra.mxu0 %v76
    %122 = vmatprep.subr.mxu0 0.0
    %123 = vmatpush1.msra.mxu0 %v75
    %124 = vmatprep.subr.mxu0 0.0
    %125 = vmatpush1.msra.mxu0 %v74
    %126 = vmatprep.subr.mxu0 0.0
    %127 = vmatpush1.msra.mxu0 %v73
    %128 = vmatprep.subr.mxu0 0.0
    %129 = vmatpush2.msra.mxu0 0.0
    %130 = vmatprep.subr.mxu0 0.0
    %131 = vmatpush2.msra.mxu0 0.0
    %132 = vmatprep.subr.mxu0 0.0
    %133 = vmatpush2.msra.mxu0 0.0
    %134 = vmatprep.subr.mxu0 0.0
    %135 = vmatpush2.msra.mxu0 0.0
    %136 = vmatprep.subr.mxu0 0.0
    %137 = vmatpush2.msra.mxu0 0.0
    %138 = vmatprep.subr.mxu0 0.0
    %139 = vmatpush2.msra.mxu0 0.0
    %140 = vmatprep.subr.mxu0 0.0
    %141 = vmatpush2.msra.mxu0 0.0
    %142 = vmatprep.subr.mxu0 0.0
    %143 = vmatpush2.msra.mxu0 0.0
    %144 = vmatprep.subr.mxu0 0.0
    %145 = vmatpush2.msra.mxu0 0.0
    %146 = vmatprep.subr.mxu0 0.0
    %147 = vmatpush2.msra.mxu0 0.0
    %148 = vmatprep.subr.mxu0 0.0
    %149 = vmatpush2.msra.mxu0 0.0
    %150 = vmatprep.subr.mxu0 0.0
    %151 = vmatpush2.msra.mxu0 0.0
    %152 = vmatprep.subr.mxu0 0.0
    %153 = vmatpush2.msra.mxu0 0.0
    %154 = vmatprep.subr.mxu0 0.0
    %155 = vmatpush2.msra.mxu0 0.0
    %156 = vmatprep.subr.mxu0 0.0
    %157 = vmatpush2.msra.mxu0 0.0
    %158 = vmatprep.subr.mxu0 0.0
    %159 = vmatpush2.msra.mxu0 0.0
    %160 = vmatprep.mubr.f32.mxu0 0.0
    %161 = vmatmul.mubr.f32.gmra.mxu0 %v72
    %v162 = vpop.f32.mrf.mxu0
    %v163 = vadd.f32 %v94, %v162
    %v164 = vpop.f32.mrf.mxu0
    %165 = vdwg.mxu0
    %v166 = vmax.f32 %v163, 0.0
    %v167 = vld [vmem:[%s5] sm:$0x1]
    %v169 = vlaneseq
    %v170 = vshrl.u32 %v169, 7
    %v171 = vsub.s32 0, %v170
    %v172 = vrot.slane %v167, %v171
    %v174 = vmul.f32 %v166, %v172
    %175 = vadd.xlane.f32.xlu0 %v174
    %v176 = vpop.xlane.xlu0 %175
    %v177 = vld [vmem:[#allocation2] sm:$0x1]
    %v179 = vlaneseq
    %v180 = vshrl.u32 %v179, 7
    %v181 = vsub.s32 0, %v180
    %v182 = vrot.slane %v177, %v181
    %v184 = vadd.f32 %v176, %v182
    %vm185 = vcmask 7168
    %186 = vst.msk [vmem:[%s7] sm:$0xff] %vm185, %v184
    // Predicated region
    $region34: #{d_forward.1} parent=1 // pred_check
      _
    $region35: #{d_forward.1} parent=1 // pred_check_branch
      %188 = sbr.rel (0) target = $region37
    $region36: #{d_forward.1} parent=1 // pred_region
      _
    $region37: #{d_forward.1} parent=1 // pred_fallthru
      _
    // Predicated region
    $region38: #{d_forward.1} parent=1 // pred_check
      _
    $region39: #{d_forward.1} parent=1 // pred_check_branch
      %190 = sbr.rel (0) target = $region41
    $region40: #{d_forward.1} parent=1 // pred_region
      _
    $region41: #{d_forward.1} parent=1 // pred_fallthru
      _
    %191 = vsyncpa [#allocation4], 1

</llo_original>
